<compile_context>
chip_gen: v7x
topology: tpu7x:2x2x1
jax: 0.10.0
libtpu: 0.0.40
codegen_flags: <defaults>
</compile_context>

<pallas_src>
import math

import jax
import jax.numpy as jnp
from jax.experimental import pallas as pl
from jax.experimental.pallas import tpu as pltpu


def _drop_path_kernel(mask_ref, x_ref, o_ref):
    # mask_ref: (TB, 1) float32 per-sample scale (mask already divided by keep_prob)
    # x_ref / o_ref: (TB, TF) tile of the flattened activations
    scale = mask_ref[...].astype(x_ref.dtype)               # stay in the narrow dtype
    o_ref[...] = (x_ref[...] * scale).astype(o_ref.dtype)   # explicit store-dtype cast


def _largest_aligned_divisor(n: int, align: int, cap: int):
    """Largest d with d % align == 0, n % d == 0, d <= cap (None if none)."""
    best = None
    cap = min(cap, n)
    d = align
    while d <= cap:
        if n % d == 0:
            best = d
        d += align
    return best


def _choose_tiles(B: int, F: int, itemsize: int, target_tile_bytes: int):
    """Pick (TB, TF) tile sizes: lane-dense, layout-legal, ~target_tile_bytes."""
    budget = max(8 * 128, target_tile_bytes // itemsize)     # elements per tile
    sub_align = {4: 8, 2: 16, 1: 32}.get(itemsize, 8)        # sublane packing per dtype

    # Batch (sublane) tile: multiple of sub_align dividing B, else full B
    # (full-dim blocks are exempt from the (8,128) divisibility rule).
    if B % sub_align == 0 and B > sub_align:
        tb = sub_align
    else:
        tb = B

    # Lane tile: largest multiple of 128 dividing F that fits the budget.
    cap_tf = max(128, budget // max(tb, 1))
    if F % 128 == 0:
        tf = _largest_aligned_divisor(F, 128, cap_tf) or 128
    else:
        tf = F  # full-dim exemption (rare path; falls back to masked partial stores)

    # If lanes are small, grow the batch tile to fill the budget (packs many
    # samples per grid step instead of one tiny tile per step).
    if B % sub_align == 0 and B > sub_align:
        tb = _largest_aligned_divisor(B, sub_align, max(sub_align, budget // tf)) or tb

    return tb, tf


def drop_path_pallas(x, drop_prob: float = 0.0, training: bool = False, *,
                     key=None, target_tile_bytes: int = 2 * 1024 * 1024):
    """Pallas implementation of drop_path(x, drop_prob, training)."""
    if drop_prob == 0.0 or not training:
        return x
    if key is None:
        raise ValueError("key must be provided in training mode with drop_prob > 0")

    keep_prob = 1.0 - drop_prob
    B = x.shape[0]
    F = int(math.prod(x.shape[1:])) if x.ndim > 1 else 1
    x2 = x.reshape(B, F)

    # Per-sample mask: floor(keep_prob + U[0,1)) in {0., 1.}  (same math as the
    # PyTorch reference, modulo the underlying RNG stream), pre-divided by keep_prob.
    u = jax.random.uniform(key, (B,), dtype=jnp.float32)
    mask = jnp.floor(keep_prob + u)
    scaled_mask = (mask / keep_prob).astype(jnp.float32).reshape(B, 1)

    tb, tf = _choose_tiles(B, F, jnp.dtype(x.dtype).itemsize, target_tile_bytes)
    assert B % tb == 0 and F % tf == 0
    grid = (B // tb, F // tf)

    out2 = pl.pallas_call(
        _drop_path_kernel,
        out_shape=jax.ShapeDtypeStruct((B, F), x.dtype),
        grid=grid,
        in_specs=[
            pl.BlockSpec((tb, 1), lambda i, j: (i, 0)),    # per-sample scale
            pl.BlockSpec((tb, tf), lambda i, j: (i, j)),   # activation tile
        ],
        out_specs=pl.BlockSpec((tb, tf), lambda i, j: (i, j)),
        compiler_params=pltpu.CompilerParams(
            dimension_semantics=("parallel", "parallel")),
    )(scaled_mask, x2)

    return out2.reshape(x.shape)


class DropPath:
    """Drop paths (Stochastic Depth) per sample."""

    def __init__(self, drop_prob=None):
        self.drop_prob = drop_prob if drop_prob is not None else 0.0
        self.training = True

    def __call__(self, x, *, key=None):
        return drop_path_pallas(x, self.drop_prob, self.training, key=key)


if __name__ == "__main__":
    root = jax.random.PRNGKey(0)
    k_x, k_mask, k_x2 = jax.random.split(root, 3)

    drop_prob = 0.3
    keep_prob = 1.0 - drop_prob

    # --- (1) float32, ViT-token layout (B, N, D), training path ---
    B, N, D = 2, 8, 128
    x = jax.random.normal(k_x, (B, N, D), dtype=jnp.float32)

    module = DropPath(drop_prob)
    module.training = True
    out = jax.block_until_ready(module(x, key=k_mask))

    u = jax.random.uniform(k_mask, (B,), dtype=jnp.float32)
    mask = jnp.floor(keep_prob + u).reshape(B, 1, 1)
    ref = x / keep_prob * mask
    assert out.shape == x.shape and out.dtype == x.dtype
    assert jnp.allclose(out, ref, atol=1e-6, rtol=1e-6), "f32 training-path mismatch"

    # --- (2) bf16 + multi-tile 2-D grid (small tile budget forces >1 lane tile) ---
    B2, N2, D2 = 8, 16, 256
    xb = jax.random.normal(k_x2, (B2, N2, D2), dtype=jnp.bfloat16)
    out_b = jax.block_until_ready(
        drop_path_pallas(xb, drop_prob, True, key=k_mask,
                         target_tile_bytes=16 * 1024))
    u2 = jax.random.uniform(k_mask, (B2,), dtype=jnp.float32)
    scale2 = (jnp.floor(keep_prob + u2) / keep_prob).astype(jnp.bfloat16)
    ref_b = xb * scale2.reshape(B2, 1, 1)
    assert out_b.dtype == jnp.bfloat16 and out_b.shape == xb.shape
    assert jnp.allclose(out_b.astype(jnp.float32), ref_b.astype(jnp.float32),
                        atol=1e-2, rtol=1e-2), "bf16 training-path mismatch"

    # --- (3) eval path is identity ---
    module.training = False
    out_eval = jax.block_until_ready(module(x))
    assert jnp.array_equal(out_eval, x), "eval path must be identity"

    print("KERNEL_OK")
</pallas_src>

<mosaic_0001>
module attributes {stable_mosaic.version = 11 : i64} {
  func.func @_drop_path_kernel(%arg0: i32, %arg1: i32, %arg2: memref<2x1xf32, #tpu.memory_space<vmem>>, %arg3: memref<2x1024xf32, #tpu.memory_space<vmem>>, %arg4: memref<2x1024xf32, #tpu.memory_space<vmem>>) attributes {dimension_semantics = [#tpu.dimension_semantics<parallel>, #tpu.dimension_semantics<parallel>], iteration_bounds = array<i64: 1, 1>, scalar_prefetch = 0 : i64, scratch_operands = 0 : i64, tpu.core_type = #tpu.core_type<tc>, window_params = [{transform_indices = @transform_0, window_bounds = array<i64: 2, 1>}, {transform_indices = @transform_1, window_bounds = array<i64: 2, 1024>}, {transform_indices = @transform_2, window_bounds = array<i64: 2, 1024>}]} {
    %c0 = arith.constant 0 : index
    %c0_0 = arith.constant 0 : index
    %0 = vector.load %arg2[%c0, %c0_0] : memref<2x1xf32, #tpu.memory_space<vmem>>, vector<2x1xf32>
    %c0_1 = arith.constant 0 : index
    %c0_2 = arith.constant 0 : index
    %1 = vector.load %arg3[%c0_1, %c0_2] : memref<2x1024xf32, #tpu.memory_space<vmem>>, vector<2x1024xf32>
    %2 = vector.broadcast %0 : vector<2x1xf32> to vector<2x1024xf32>
    %3 = arith.mulf %1, %2 : vector<2x1024xf32>
    %c0_3 = arith.constant 0 : index
    %c0_4 = arith.constant 0 : index
    %4 = vector.load %arg4[%c0_3, %c0_4] : memref<2x1024xf32, #tpu.memory_space<vmem>>, vector<2x1024xf32>
    tpu.vector_store %arg4[%c0_3, %c0_4], %3 {strides = array<i32>} : memref<2x1024xf32, #tpu.memory_space<vmem>>, vector<2x1024xf32>,
    return
  }
  func.func @transform_0(%arg0: i32, %arg1: i32) -> (i32, i32) {
    %c0_i32 = arith.constant 0 : i32
    %c0_i32_0 = arith.constant 0 : i32
    return %arg0, %c0_i32 : i32, i32
  }
  func.func @transform_1(%arg0: i32, %arg1: i32) -> (i32, i32) {
    %c0_i32 = arith.constant 0 : i32
    return %arg0, %arg1 : i32, i32
  }
  func.func @transform_2(%arg0: i32, %arg1: i32) -> (i32, i32) {
    %c0_i32 = arith.constant 0 : i32
    return %arg0, %arg1 : i32, i32
  }
}

</mosaic_0001>

<llo_original>
// kernel: tpu_custom_call.1
$region0: #{tpu_custom_call.1}
  #allocation0 [shape = 'u32[]', space=smem, size = 0x4, offset = 0x4, fixed_abs, tag = 'smem constant byte address 0x4 - core index']
  #allocation1 [shape = 'u32[144,128]{1,0:T(1,128)}', space=vmem, size = 0x12000, scoped, tag = 'internal scratch']
  %s0 = inlined_call_operand.vmem [shape: f32[2,1], index: 0, kind: input, shape index: {}]
  %s1 = inlined_call_operand.hbm [shape: f32[2,1024], index: 1, kind: input, shape index: {}]
  %s2 = inlined_call_operand.hbm [shape: f32[2,1024], index: 2, kind: output, shape index: {}]
  %s3 = sld [smem:[#allocation0]]
  $region22: #{tpu_custom_call.1} parent=0
    _
  %s5 = ssub.s32 1, %s3
  %s6 = scalar_select 0, %s5, %s3
  $region1: #{tpu_custom_call.1} parent=0
    #allocation2 [shape = 'u8[8192]{0}', space=vmem, size = 0x2000, scoped, tag = 'input window, operand 1, single buffered']
    #allocation3 [shape = 's32[1]{0}', space=sflag, size = 0x4, scoped, tag = 'scoped memory for tpu_custom_call.1']
    #allocation4 [shape = 's32[1]{0}', space=sflag, size = 0x4, scoped, tag = 'scoped memory for tpu_custom_call.1']
    #allocation5 [shape = 'u8[8192]{0}', space=vmem, size = 0x2000, scoped, tag = 'output window, operand 0, single buffered']
    %7 = vsyncpa [#allocation3], 0
    %8 = vsyncpa [#allocation4], 0
    // Predicated region
    $region2: #{tpu_custom_call.1} parent=1 // pred_check
      _
    $region3: #{tpu_custom_call.1} parent=1 // pred_check_branch
      %10 = sbr.rel (0) target = $region5
    $region4: #{tpu_custom_call.1} parent=1 // pred_region
      _
    $region5: #{tpu_custom_call.1} parent=1 // pred_fallthru
      _
    // Predicated region
    $region6: #{tpu_custom_call.1} parent=1 // pred_check
      _
    $region7: #{tpu_custom_call.1} parent=1 // pred_check_branch
      %12 = sbr.rel (0) target = $region9
    $region8: #{tpu_custom_call.1} parent=1 // pred_region
      %s14 = ssub.s32 256, 256
      %15 = vsyncadd [#allocation3], %s14
      %s17 = sshll.u32 [#allocation2], 4
      %s18 = int_to_ptr.vmem [resolvable:$true] %s17
      %20 = dma.hbm_to_vmem [thread:$0]  %s1, 256, %s18, [#allocation3]
    $region9: #{tpu_custom_call.1} parent=1 // pred_fallthru
      _
    // Predicated region
    $region10: #{tpu_custom_call.1} parent=1 // pred_check
      _
    $region11: #{tpu_custom_call.1} parent=1 // pred_check_branch
      %22 = sbr.rel (0) target = $region13
    $region12: #{tpu_custom_call.1} parent=1 // pred_region
      %23 = dma.done [#allocation3], 256
    $region13: #{tpu_custom_call.1} parent=1 // pred_fallthru
      _
    %v24 = vld [vmem:[%s0] sm:$0x3]
    %v25 = vld [vmem:[#allocation2] sm:$0xff]
    %v26 = vld [vmem:[#allocation2 + $0x8] sm:$0xff]
    %28 = vset.pattern.permute.xlu0 0
    %29 = vperm.xlu0 %28, %v24
    %v30 = vpop.permute.xlu0 %29
    %v32 = vunpack.c.l.s4 269488144
    %v33 = vunpack.c.0.s8 %v32
    %v34 = vlaneseq
    %v35 = vshrl.u32 %v34, 7
    %v36 = vsub.s32 %v33, %v35
    %v37 = vrot.slane %v30, %v36
    %v39 = vmul.f32 %v25, %v37
    %v40 = vmul.f32 %v26, %v37
    %41 = vst [vmem:[#allocation5] sm:$0xff] %v39
    %42 = vst [vmem:[#allocation5 + $0x8] sm:$0xff] %v40
    // Predicated region
    $region14: #{tpu_custom_call.1} parent=1 // pred_check
      _
    $region15: #{tpu_custom_call.1} parent=1 // pred_check_branch
      %44 = sbr.rel (0) target = $region17
    $region16: #{tpu_custom_call.1} parent=1 // pred_region
      %s46 = ssub.s32 256, 256
      %47 = vsyncadd [#allocation4], %s46
      %s49 = sshll.u32 [#allocation5], 4
      %s50 = int_to_ptr.vmem [resolvable:$true] %s49
      %52 = dma.vmem_to_hbm [thread:$0]  %s50, 256, %s2, [#allocation4]
    $region17: #{tpu_custom_call.1} parent=1 // pred_fallthru
      _
    // Predicated region
    $region18: #{tpu_custom_call.1} parent=1 // pred_check
      _
    $region19: #{tpu_custom_call.1} parent=1 // pred_check_branch
      %54 = sbr.rel (0) target = $region21
    $region20: #{tpu_custom_call.1} parent=1 // pred_region
      %55 = dma.done [#allocation4], 256
    $region21: #{tpu_custom_call.1} parent=1 // pred_fallthru
      _
    %56 = vsyncpa [#allocation3], 1
    %57 = vsyncpa [#allocation4], 1

</llo_original>
